<compile_context>
chip_gen: v7x
topology: tpu7x:2x2x1
jax: 0.10.0
libtpu: 0.0.40
codegen_flags: <defaults>
</compile_context>

<pallas_src>
import jax
import jax.numpy as jnp
from jax.experimental import pallas as pl
from jax.experimental.pallas import tpu as pltpu


def _hypernet_kernel(x_ref, w1_ref, b1_ref, w2_ref, b2_ref, o_ref):
    # Fused first layer: (TM, S) @ (S, 2H) + b -> ReLU
    x = x_ref[...]
    h = jnp.dot(x, w1_ref[...], preferred_element_type=jnp.float32) + b1_ref[...]
    h = jnp.maximum(h, 0.0)
    # Fused block-diagonal second layer: (TM, 2H) @ (2H, P) + b -> |.|
    y = jnp.dot(h, w2_ref[...], preferred_element_type=jnp.float32) + b2_ref[...]
    o_ref[...] = jnp.abs(y).astype(o_ref.dtype)


def pack_params(params):
    """One-time packing of the two hypernet branches into fused operands.

    Call at init / whenever params change, NOT per forward step.
    Returns dict with:
      w1c (S, 2H), b1c (1, 2H)             -- fused first layer
      w2c (2H, P), b2c (1, P)  P = 128-pad -- block-diagonal second layer
      num_agents                            -- for slicing the output slab
    """
    S, H = params["w11"].shape
    A = params["w12"].shape[1]
    P = max(128, ((2 * A + 127) // 128) * 128)

    w1c = jnp.concatenate([params["w11"], params["w21"]], axis=1)
    b1c = jnp.concatenate([params["b11"], params["b21"]], axis=1)

    w2c = (jnp.zeros((2 * H, P), jnp.float32)
           .at[:H, :A].set(params["w12"])
           .at[H:, A:2 * A].set(params["w22"]))
    b2c = (jnp.zeros((1, P), jnp.float32)
           .at[:, :A].set(params["b12"])
           .at[:, A:2 * A].set(params["b22"]))

    return dict(w1c=w1c, b1c=b1c, w2c=w2c, b2c=b2c, num_agents=A)


def hypernetwork_forward(global_state, packed, *, batch_tile=2048,
                         out_dtype=jnp.float32, small_batch_threshold=256,
                         force_pallas=False):
    """HyperNetwork forward using pre-packed params.

    global_state: (B, state_dim) f32
    packed: output of pack_params()
    Returns (w1, w2), each (B, num_agents).
    """
    B, S = global_state.shape
    A = packed["num_agents"]
    w1c, b1c, w2c, b2c = packed["w1c"], packed["b1c"], packed["w2c"], packed["b2c"]
    H2 = w1c.shape[1]       # 2 * hidden
    P = w2c.shape[1]        # lane-dense padded output width

    # Small-batch fallback: pallas_call fixed cost dominates below this size.
    if (B < small_batch_threshold) and not force_pallas:
        h = jnp.maximum(global_state @ w1c + b1c, 0.0)
        y = jnp.abs(h @ w2c + b2c).astype(out_dtype)
        return y[:, :A], y[:, A:2 * A]

    # --- batch tile selection -----------------------------------------------
    # For B >= 16 guarantee >= 2 grid steps so the "parallel" batch axis gives
    # v7x's second TensorCore work; keep TM a multiple of 8 (or == B).
    if B >= 16:
        half = -(-B // 2)                       # cdiv(B, 2)
        TM = min(batch_tile, ((half + 7) // 8) * 8)
    else:
        TM = B                                   # block dim == full array dim
    num_tiles = pl.cdiv(B, TM)
    grid = (num_tiles,)

    # Deeper x pipelining only pays off when there are enough steps.
    x_buffers = 3 if num_tiles >= 3 else 2

    # --- VMEM budget from the real footprint ---------------------------------
    f32 = 4
    out_bytes = jnp.dtype(out_dtype).itemsize
    vmem_bytes = (
        x_buffers * TM * S * f32                 # streamed x tiles
        + 2 * TM * P * out_bytes                 # double-buffered output tile
        + (S * H2 + H2 + H2 * P + P) * f32       # resident weights/biases (once)
        + TM * H2 * f32                          # intermediate h
    )
    vmem_bytes = int(vmem_bytes * 1.25)          # margin for compiler scratch
    vmem_bytes = min(max(vmem_bytes, 8 * 1024 * 1024), 40 * 1024 * 1024)

    out = pl.pallas_call(
        _hypernet_kernel,
        out_shape=jax.ShapeDtypeStruct((B, P), out_dtype),
        grid=grid,
        in_specs=[
            # x: batch-tiled, deeper pipeline to hide DMA latency
            pl.BlockSpec((TM, S), lambda i: (i, 0),
                         pipeline_mode=pl.Buffered(x_buffers)),
            # fused weights/biases: constant index -> resident, single-buffered
            pl.BlockSpec((S, H2), lambda i: (0, 0), pipeline_mode=pl.Buffered(1)),
            pl.BlockSpec((1, H2), lambda i: (0, 0), pipeline_mode=pl.Buffered(1)),
            pl.BlockSpec((H2, P), lambda i: (0, 0), pipeline_mode=pl.Buffered(1)),
            pl.BlockSpec((1, P), lambda i: (0, 0), pipeline_mode=pl.Buffered(1)),
        ],
        out_specs=pl.BlockSpec((TM, P), lambda i: (i, 0)),  # lane-dense slab
        compiler_params=pltpu.CompilerParams(
            dimension_semantics=("parallel",),
            vmem_limit_bytes=vmem_bytes,
        ),
    )(global_state, w1c, b1c, w2c, b2c)

    # Slice the two heads back out of the lane-dense slab.
    w1 = out[:, :A]
    w2 = out[:, A:2 * A]
    return w1, w2


def init_params(key, state_dim, num_agents, hidden=128):
    """Deterministic init mimicking PyTorch nn.Linear default
    (U[-1/sqrt(fan_in), 1/sqrt(fan_in)]); weights stored as (in, out)."""
    keys = jax.random.split(key, 8)

    def lin(kw, kb, fan_in, fan_out):
        bound = 1.0 / jnp.sqrt(fan_in)
        w = jax.random.uniform(kw, (fan_in, fan_out), jnp.float32, -bound, bound)
        b = jax.random.uniform(kb, (1, fan_out), jnp.float32, -bound, bound)
        return w, b

    w11, b11 = lin(keys[0], keys[1], state_dim, hidden)
    w12, b12 = lin(keys[2], keys[3], hidden, num_agents)
    w21, b21 = lin(keys[4], keys[5], state_dim, hidden)
    w22, b22 = lin(keys[6], keys[7], hidden, num_agents)
    return dict(w11=w11, b11=b11, w12=w12, b12=b12,
                w21=w21, b21=b21, w22=w22, b22=b22)


def reference_forward(global_state, p):
    h1 = jnp.maximum(global_state @ p["w11"] + p["b11"], 0.0)
    w1 = jnp.abs(h1 @ p["w12"] + p["b12"])
    h2 = jnp.maximum(global_state @ p["w21"] + p["b21"], 0.0)
    w2 = jnp.abs(h2 @ p["w22"] + p["b22"])
    return w1, w2


if __name__ == "__main__":
    key = jax.random.PRNGKey(0)
    k_x, k_p, k_x2 = jax.random.split(key, 3)

    batch = 8
    state_dim = 32
    num_agents = 4

    params = init_params(k_p, state_dim, num_agents)
    packed = pack_params(params)      # one-time packing (outside the hot path)

    # Small-batch run, forcing the Pallas path so the kernel is exercised.
    global_state = jax.random.normal(k_x, (batch, state_dim), jnp.float32)
    w1, w2 = hypernetwork_forward(global_state, packed, force_pallas=True)
    jax.block_until_ready((w1, w2))

    r1, r2 = reference_forward(global_state, params)
    assert w1.shape == (batch, num_agents) and w2.shape == (batch, num_agents)
    assert jnp.allclose(w1, r1, atol=1e-5, rtol=1e-5)
    assert jnp.allclose(w2, r2, atol=1e-5, rtol=1e-5)

    # Multi-tile grid with a partial trailing tile (exercises the >=2-tile
    # selection for the parallel batch axis and the clipped block write).
    x_big = jax.random.normal(k_x2, (40, state_dim), jnp.float32)
    w1b, w2b = hypernetwork_forward(x_big, packed, force_pallas=True)
    jax.block_until_ready((w1b, w2b))
    r1b, r2b = reference_forward(x_big, params)
    assert jnp.allclose(w1b, r1b, atol=1e-5, rtol=1e-5)
    assert jnp.allclose(w2b, r2b, atol=1e-5, rtol=1e-5)

    print("KERNEL_OK")
</pallas_src>

<mosaic_0001>
module attributes {stable_mosaic.version = 11 : i64} {
  func.func @_hypernet_kernel(%arg0: i32, %arg1: memref<8x32xf32, #tpu.memory_space<vmem>>, %arg2: memref<32x256xf32, #tpu.memory_space<vmem>>, %arg3: memref<1x256xf32, #tpu.memory_space<vmem>>, %arg4: memref<256x128xf32, #tpu.memory_space<vmem>>, %arg5: memref<1x128xf32, #tpu.memory_space<vmem>>, %arg6: memref<8x128xf32, #tpu.memory_space<vmem>>) attributes {dimension_semantics = [#tpu.dimension_semantics<parallel>], iteration_bounds = array<i64: 1>, scalar_prefetch = 0 : i64, scratch_operands = 0 : i64, tpu.core_type = #tpu.core_type<tc>, window_params = [{pipeline_mode = #tpu.pipeline_mode<double_buffered>, transform_indices = @transform_0, window_bounds = array<i64: 8, 32>}, {pipeline_mode = #tpu.pipeline_mode<synchronous>, transform_indices = @transform_1, window_bounds = array<i64: 32, 256>}, {pipeline_mode = #tpu.pipeline_mode<synchronous>, transform_indices = @transform_2, window_bounds = array<i64: 1, 256>}, {pipeline_mode = #tpu.pipeline_mode<synchronous>, transform_indices = @transform_3, window_bounds = array<i64: 256, 128>}, {pipeline_mode = #tpu.pipeline_mode<synchronous>, transform_indices = @transform_4, window_bounds = array<i64: 1, 128>}, {transform_indices = @transform_5, window_bounds = array<i64: 8, 128>}]} {
    %c0 = arith.constant 0 : index
    %c0_0 = arith.constant 0 : index
    %0 = vector.load %arg1[%c0, %c0_0] : memref<8x32xf32, #tpu.memory_space<vmem>>, vector<8x32xf32>
    %c0_1 = arith.constant 0 : index
    %c0_2 = arith.constant 0 : index
    %1 = vector.load %arg2[%c0_1, %c0_2] : memref<32x256xf32, #tpu.memory_space<vmem>>, vector<32x256xf32>
    %cst = arith.constant dense<0.000000e+00> : vector<8x256xf32>
    %2 = tpu.matmul %0, %1, %cst {dimension_numbers = #tpu.dot_dimension_numbers<[1], [0], [0], [1], [0, 0, 1, 1], [], []>} : vector<8x32xf32>, vector<32x256xf32>, vector<8x256xf32> -> vector<8x256xf32>
    %c0_3 = arith.constant 0 : index
    %c0_4 = arith.constant 0 : index
    %3 = vector.load %arg3[%c0_3, %c0_4] : memref<1x256xf32, #tpu.memory_space<vmem>>, vector<1x256xf32>
    %4 = vector.broadcast %3 : vector<1x256xf32> to vector<8x256xf32>
    %5 = arith.addf %2, %4 : vector<8x256xf32>
    %cst_5 = arith.constant 0.000000e+00 : f32
    %6 = vector.broadcast %cst_5 : f32 to vector<8x256xf32>
    %7 = arith.maximumf %5, %6 : vector<8x256xf32>
    %c0_6 = arith.constant 0 : index
    %c0_7 = arith.constant 0 : index
    %8 = vector.load %arg4[%c0_6, %c0_7] : memref<256x128xf32, #tpu.memory_space<vmem>>, vector<256x128xf32>
    %cst_8 = arith.constant dense<0.000000e+00> : vector<8x128xf32>
    %9 = tpu.matmul %7, %8, %cst_8 {dimension_numbers = #tpu.dot_dimension_numbers<[1], [0], [0], [1], [0, 0, 1, 1], [], []>} : vector<8x256xf32>, vector<256x128xf32>, vector<8x128xf32> -> vector<8x128xf32>
    %c0_9 = arith.constant 0 : index
    %c0_10 = arith.constant 0 : index
    %10 = vector.load %arg5[%c0_9, %c0_10] : memref<1x128xf32, #tpu.memory_space<vmem>>, vector<1x128xf32>
    %11 = vector.broadcast %10 : vector<1x128xf32> to vector<8x128xf32>
    %12 = arith.addf %9, %11 : vector<8x128xf32>
    %13 = math.absf %12 : vector<8x128xf32>
    %c0_11 = arith.constant 0 : index
    %c0_12 = arith.constant 0 : index
    %14 = vector.load %arg6[%c0_11, %c0_12] : memref<8x128xf32, #tpu.memory_space<vmem>>, vector<8x128xf32>
    tpu.vector_store %arg6[%c0_11, %c0_12], %13 {strides = array<i32>} : memref<8x128xf32, #tpu.memory_space<vmem>>, vector<8x128xf32>,
    return
  }
  func.func @transform_0(%arg0: i32) -> (i32, i32) {
    %c0_i32 = arith.constant 0 : i32
    %c0_i32_0 = arith.constant 0 : i32
    return %arg0, %c0_i32 : i32, i32
  }
  func.func @transform_1(%arg0: i32) -> (i32, i32) {
    %c0_i32 = arith.constant 0 : i32
    %c0_i32_0 = arith.constant 0 : i32
    %c0_i32_1 = arith.constant 0 : i32
    return %c0_i32, %c0_i32_0 : i32, i32
  }
  func.func @transform_2(%arg0: i32) -> (i32, i32) {
    %c0_i32 = arith.constant 0 : i32
    %c0_i32_0 = arith.constant 0 : i32
    %c0_i32_1 = arith.constant 0 : i32
    return %c0_i32, %c0_i32_0 : i32, i32
  }
  func.func @transform_3(%arg0: i32) -> (i32, i32) {
    %c0_i32 = arith.constant 0 : i32
    %c0_i32_0 = arith.constant 0 : i32
    %c0_i32_1 = arith.constant 0 : i32
    return %c0_i32, %c0_i32_0 : i32, i32
  }
  func.func @transform_4(%arg0: i32) -> (i32, i32) {
    %c0_i32 = arith.constant 0 : i32
    %c0_i32_0 = arith.constant 0 : i32
    %c0_i32_1 = arith.constant 0 : i32
    return %c0_i32, %c0_i32_0 : i32, i32
  }
  func.func @transform_5(%arg0: i32) -> (i32, i32) {
    %c0_i32 = arith.constant 0 : i32
    %c0_i32_0 = arith.constant 0 : i32
    return %arg0, %c0_i32 : i32, i32
  }
}

</mosaic_0001>

<llo_original>
// kernel: tpu_custom_call.1
$region0: #{tpu_custom_call.1}
  #allocation0 [shape = 'u32[]', space=smem, size = 0x4, offset = 0x4, fixed_abs, tag = 'smem constant byte address 0x4 - core index']
  #allocation1 [shape = 'u32[144,128]{1,0:T(1,128)}', space=vmem, size = 0x12000, scoped, tag = 'internal scratch']
  %s0 = inlined_call_operand.hbm [shape: f32[8,32], index: 0, kind: input, shape index: {}]
  %s1 = inlined_call_operand.hbm [shape: f32[32,256], index: 1, kind: input, shape index: {}]
  %s2 = inlined_call_operand.vmem [shape: f32[1,256], index: 2, kind: input, shape index: {}]
  %s3 = inlined_call_operand.hbm [shape: f32[256,128], index: 3, kind: input, shape index: {}]
  %s4 = inlined_call_operand.vmem [shape: f32[1,128], index: 4, kind: input, shape index: {}]
  %s5 = inlined_call_operand.hbm [shape: f32[8,128], index: 5, kind: output, shape index: {}]
  %s6 = sld [smem:[#allocation0]]
  $region42: #{tpu_custom_call.1} parent=0
    _
  %s8 = ssub.s32 1, %s6
  %s9 = scalar_select 0, %s8, %s6
  $region1: #{tpu_custom_call.1} parent=0
    #allocation2 [shape = 'u8[4096]{0}', space=vmem, size = 0x1000, scoped, tag = 'input window, operand 0, single buffered']
    #allocation3 [shape = 's32[1]{0}', space=sflag, size = 0x4, scoped, tag = 'scoped memory for tpu_custom_call.1']
    #allocation4 [shape = 's32[1]{0}', space=sflag, size = 0x4, scoped, tag = 'scoped memory for tpu_custom_call.1']
    #allocation5 [shape = 'u8[32768]{0}', space=vmem, size = 0x8000, scoped, tag = 'input window, operand 1, single buffered']
    #allocation6 [shape = 's32[1]{0}', space=sflag, size = 0x4, scoped, tag = 'scoped memory for tpu_custom_call.1']
    #allocation7 [shape = 'u8[131072]{0}', space=vmem, size = 0x20000, scoped, tag = 'input window, operand 3, single buffered']
    #allocation8 [shape = 'u8[4096]{0}', space=vmem, size = 0x1000, scoped, tag = 'output window, operand 0, single buffered']
    %10 = vsyncpa [#allocation3], 0
    %11 = vsyncpa [#allocation6], 0
    %12 = vsyncpa [#allocation4], 0
    // Predicated region
    $region2: #{tpu_custom_call.1} parent=1 // pred_check
      _
    $region3: #{tpu_custom_call.1} parent=1 // pred_check_branch
      %14 = sbr.rel (0) target = $region5
    $region4: #{tpu_custom_call.1} parent=1 // pred_region
      %s16 = ssub.s32 128, 128
      %17 = vsyncadd [#allocation3], %s16
      %s19 = sshll.u32 [#allocation2], 4
      %s20 = int_to_ptr.vmem [resolvable:$true] %s19
      %22 = dma.hbm_to_vmem [thread:$0]  %s0, 128, %s20, [#allocation3]
    $region5: #{tpu_custom_call.1} parent=1 // pred_fallthru
      _
    // Predicated region
    $region6: #{tpu_custom_call.1} parent=1 // pred_check
      _
    $region7: #{tpu_custom_call.1} parent=1 // pred_check_branch
      %24 = sbr.rel (0) target = $region9
    $region8: #{tpu_custom_call.1} parent=1 // pred_region
      %s26 = ssub.s32 1024, 1024
      %27 = vsyncadd [#allocation6], %s26
      %s28 = sshll.u32 [#allocation5], 4
      %s29 = int_to_ptr.vmem [resolvable:$true] %s28
      %34 = dma.hbm_to_vmem [thread:$0]  %s1, 1024, %s29, [#allocation6], 256, 256, 16
    $region9: #{tpu_custom_call.1} parent=1 // pred_fallthru
      _
    // Predicated region
    $region10: #{tpu_custom_call.1} parent=1 // pred_check
      _
    $region11: #{tpu_custom_call.1} parent=1 // pred_check_branch
      %36 = sbr.rel (0) target = $region13
    $region12: #{tpu_custom_call.1} parent=1 // pred_region
      _
    $region13: #{tpu_custom_call.1} parent=1 // pred_fallthru
      _
    // Predicated region
    $region14: #{tpu_custom_call.1} parent=1 // pred_check
      _
    $region15: #{tpu_custom_call.1} parent=1 // pred_check_branch
      %38 = sbr.rel (0) target = $region17
    $region16: #{tpu_custom_call.1} parent=1 // pred_region
      %s40 = ssub.s32 4096, 4096
      %41 = vsyncadd [#allocation6], %s40
      %s42 = sshll.u32 [#allocation7], 4
      %s43 = int_to_ptr.vmem [resolvable:$true] %s42
      %48 = dma.hbm_to_vmem [thread:$0]  %s3, 4096, %s43, [#allocation6], 128, 128, 8
    $region17: #{tpu_custom_call.1} parent=1 // pred_fallthru
      _
    // Predicated region
    $region18: #{tpu_custom_call.1} parent=1 // pred_check
      _
    $region19: #{tpu_custom_call.1} parent=1 // pred_check_branch
      %50 = sbr.rel (0) target = $region21
    $region20: #{tpu_custom_call.1} parent=1 // pred_region
      _
    $region21: #{tpu_custom_call.1} parent=1 // pred_fallthru
      _
    // Predicated region
    $region22: #{tpu_custom_call.1} parent=1 // pred_check
      _
    $region23: #{tpu_custom_call.1} parent=1 // pred_check_branch
      %52 = sbr.rel (0) target = $region25
    $region24: #{tpu_custom_call.1} parent=1 // pred_region
      %53 = dma.done [#allocation3], 128
    $region25: #{tpu_custom_call.1} parent=1 // pred_fallthru
      _
    // Predicated region
    $region26: #{tpu_custom_call.1} parent=1 // pred_check
      _
    $region27: #{tpu_custom_call.1} parent=1 // pred_check_branch
      %55 = sbr.rel (0) target = $region29
    $region28: #{tpu_custom_call.1} parent=1 // pred_region
      %56 = dma.done [#allocation6], 1024
    $region29: #{tpu_custom_call.1} parent=1 // pred_fallthru
      _
    // Predicated region
    $region30: #{tpu_custom_call.1} parent=1 // pred_check
      _
    $region31: #{tpu_custom_call.1} parent=1 // pred_check_branch
      %58 = sbr.rel (0) target = $region33
    $region32: #{tpu_custom_call.1} parent=1 // pred_region
      %59 = dma.done [#allocation6], 4096
    $region33: #{tpu_custom_call.1} parent=1 // pred_fallthru
      _
    %v60 = vld [vmem:[#allocation2] sm:$0xff]
    %v61 = vld [vmem:[#allocation5] sm:$0xff]
    %v62 = vld [vmem:[#allocation5 + $0x8] sm:$0xff]
    %v63 = vld [vmem:[#allocation5 + $0x10] sm:$0xff]
    %v64 = vld [vmem:[#allocation5 + $0x18] sm:$0xff]
    %v65 = vld [vmem:[#allocation5 + $0x20] sm:$0xff]
    %v66 = vld [vmem:[#allocation5 + $0x28] sm:$0xff]
    %v67 = vld [vmem:[#allocation5 + $0x30] sm:$0xff]
    %v68 = vld [vmem:[#allocation5 + $0x38] sm:$0xff]
    %v69 = vld [vmem:[%s2] sm:$0x3]
    %v71 = vlaneseq
    %v72 = vshrl.u32 %v71, 7
    %v73 = vsub.s32 0, %v72
    %v74 = vrot.slane %v69, %v73
    %v75 = vlaneseq
    %v76 = vshrl.u32 %v75, 7
    %v77 = vsub.s32 1, %v76
    %v78 = vrot.slane %v69, %v77
    %vm81 = vcmask 261120
    %v83 = vsel %vm81, %v60, 0
    %85 = vmatprep.subr.mxu0 %v62
    %86 = vmatpush1.msra.mxu0 %v61
    %87 = vmatprep.subr.mxu0 %v64
    %88 = vmatpush1.msra.mxu0 %v63
    %89 = vmatprep.subr.mxu0 %v66
    %90 = vmatpush1.msra.mxu0 %v65
    %91 = vmatprep.subr.mxu0 %v68
    %92 = vmatpush1.msra.mxu0 %v67
    %93 = vmatprep.subr.mxu0 0.0
    %94 = vmatpush1.msra.mxu0 0.0
    %95 = vmatprep.subr.mxu0 0.0
    %96 = vmatpush1.msra.mxu0 0.0
    %97 = vmatprep.subr.mxu0 0.0
    %98 = vmatpush1.msra.mxu0 0.0
    %99 = vmatprep.subr.mxu0 0.0
    %100 = vmatpush1.msra.mxu0 0.0
    %101 = vmatprep.subr.mxu0 0.0
    %102 = vmatpush1.msra.mxu0 0.0
    %103 = vmatprep.subr.mxu0 0.0
    %104 = vmatpush1.msra.mxu0 0.0
    %105 = vmatprep.subr.mxu0 0.0
    %106 = vmatpush1.msra.mxu0 0.0
    %107 = vmatprep.subr.mxu0 0.0
    %108 = vmatpush1.msra.mxu0 0.0
    %109 = vmatprep.subr.mxu0 0.0
    %110 = vmatpush1.msra.mxu0 0.0
    %111 = vmatprep.subr.mxu0 0.0
    %112 = vmatpush1.msra.mxu0 0.0
    %113 = vmatprep.subr.mxu0 0.0
    %114 = vmatpush1.msra.mxu0 0.0
    %115 = vmatprep.subr.mxu0 0.0
    %116 = vmatpush1.msra.mxu0 0.0
    %117 = vmatprep.subr.mxu0 0.0
    %118 = vmatpush1.msra.mxu0 0.0
    %119 = vmatprep.subr.mxu0 0.0
    %120 = vmatpush1.msra.mxu0 0.0
    %121 = vmatprep.subr.mxu0 0.0
    %122 = vmatpush1.msra.mxu0 0.0
    %123 = vmatprep.subr.mxu0 0.0
    %124 = vmatpush1.msra.mxu0 0.0
    %125 = vmatprep.subr.mxu0 0.0
    %126 = vmatpush1.msra.mxu0 0.0
    %127 = vmatprep.subr.mxu0 0.0
    %128 = vmatpush1.msra.mxu0 0.0
    %129 = vmatprep.subr.mxu0 0.0
    %130 = vmatpush1.msra.mxu0 0.0
    %131 = vmatprep.subr.mxu0 0.0
    %132 = vmatpush1.msra.mxu0 0.0
    %133 = vmatprep.subr.mxu0 0.0
    %134 = vmatpush1.msra.mxu0 0.0
    %135 = vmatprep.subr.mxu0 0.0
    %136 = vmatpush1.msra.mxu0 0.0
    %137 = vmatprep.subr.mxu0 0.0
    %138 = vmatpush1.msra.mxu0 0.0
    %139 = vmatprep.subr.mxu0 0.0
    %140 = vmatpush1.msra.mxu0 0.0
    %141 = vmatprep.subr.mxu0 0.0
    %142 = vmatpush1.msra.mxu0 0.0
    %143 = vmatprep.subr.mxu0 0.0
    %144 = vmatpush1.msra.mxu0 0.0
    %145 = vmatprep.subr.mxu0 0.0
    %146 = vmatpush1.msra.mxu0 0.0
    %147 = vmatprep.subr.mxu0 0.0
    %148 = vmatpush1.msra.mxu0 0.0
    %149 = vmatprep.mubr.f32.mxu0 0.0
    %150 = vmatmul.mubr.f32.gmra.mrb[0].mxu0 %v83
    %v151 = vpop.f32.mrb[0].mxu0
    %v152 = vadd.f32 %v74, %v151
    %v153 = vpop.f32.mrb[0].mxu0
    %v154 = vadd.f32 %v78, %v153
    %155 = vdwg.mxu0
    %v156 = vmax.f32 %v152, 0.0
    %v157 = vmax.f32 %v154, 0.0
    %v158 = vld [vmem:[#allocation7] sm:$0xff]
    %v159 = vld [vmem:[#allocation7 + $0x8] sm:$0xff]
    %v160 = vld [vmem:[#allocation7 + $0x10] sm:$0xff]
    %v161 = vld [vmem:[#allocation7 + $0x18] sm:$0xff]
    %v162 = vld [vmem:[#allocation7 + $0x20] sm:$0xff]
    %v163 = vld [vmem:[#allocation7 + $0x28] sm:$0xff]
    %v164 = vld [vmem:[#allocation7 + $0x30] sm:$0xff]
    %v165 = vld [vmem:[#allocation7 + $0x38] sm:$0xff]
    %v166 = vld [vmem:[#allocation7 + $0x40] sm:$0xff]
    %v167 = vld [vmem:[#allocation7 + $0x48] sm:$0xff]
    %v168 = vld [vmem:[#allocation7 + $0x50] sm:$0xff]
    %v169 = vld [vmem:[#allocation7 + $0x58] sm:$0xff]
    %v170 = vld [vmem:[#allocation7 + $0x60] sm:$0xff]
    %v171 = vld [vmem:[#allocation7 + $0x68] sm:$0xff]
    %v172 = vld [vmem:[#allocation7 + $0x70] sm:$0xff]
    %v173 = vld [vmem:[#allocation7 + $0x78] sm:$0xff]
    %v174 = vld [vmem:[#allocation7 + $0x80] sm:$0xff]
    %v175 = vld [vmem:[#allocation7 + $0x88] sm:$0xff]
    %v176 = vld [vmem:[#allocation7 + $0x90] sm:$0xff]
    %v177 = vld [vmem:[#allocation7 + $0x98] sm:$0xff]
    %v178 = vld [vmem:[#allocation7 + $0xa0] sm:$0xff]
    %v179 = vld [vmem:[#allocation7 + $0xa8] sm:$0xff]
    %v180 = vld [vmem:[#allocation7 + $0xb0] sm:$0xff]
    %v181 = vld [vmem:[#allocation7 + $0xb8] sm:$0xff]
    %v182 = vld [vmem:[#allocation7 + $0xc0] sm:$0xff]
    %v183 = vld [vmem:[#allocation7 + $0xc8] sm:$0xff]
    %v184 = vld [vmem:[#allocation7 + $0xd0] sm:$0xff]
    %v185 = vld [vmem:[#allocation7 + $0xd8] sm:$0xff]
    %v186 = vld [vmem:[#allocation7 + $0xe0] sm:$0xff]
    %v187 = vld [vmem:[#allocation7 + $0xe8] sm:$0xff]
    %v188 = vld [vmem:[#allocation7 + $0xf0] sm:$0xff]
    %v189 = vld [vmem:[#allocation7 + $0xf8] sm:$0xff]
    %v190 = vld [vmem:[%s4] sm:$0x1]
    %v192 = vlaneseq
    %v193 = vshrl.u32 %v192, 7
    %v194 = vsub.s32 0, %v193
    %v195 = vrot.slane %v190, %v194
    %197 = vmatprep.subr.mxu0 0.0
    %198 = vmatpush1.msra.mxu0 %v158
    %199 = vmatprep.subr.mxu0 0.0
    %200 = vmatpush1.msra.mxu0 %v159
    %201 = vmatprep.subr.mxu0 0.0
    %202 = vmatpush1.msra.mxu0 %v160
    %203 = vmatprep.subr.mxu0 0.0
    %204 = vmatpush1.msra.mxu0 %v161
    %205 = vmatprep.subr.mxu0 0.0
    %206 = vmatpush1.msra.mxu0 %v162
    %207 = vmatprep.subr.mxu0 0.0
    %208 = vmatpush1.msra.mxu0 %v163
    %209 = vmatprep.subr.mxu0 0.0
    %210 = vmatpush1.msra.mxu0 %v164
    %211 = vmatprep.subr.mxu0 0.0
    %212 = vmatpush1.msra.mxu0 %v165
    %213 = vmatprep.subr.mxu0 0.0
    %214 = vmatpush1.msra.mxu0 %v166
    %215 = vmatprep.subr.mxu0 0.0
    %216 = vmatpush1.msra.mxu0 %v167
    %217 = vmatprep.subr.mxu0 0.0
    %218 = vmatpush1.msra.mxu0 %v168
    %219 = vmatprep.subr.mxu0 0.0
    %220 = vmatpush1.msra.mxu0 %v169
    %221 = vmatprep.subr.mxu0 0.0
    %222 = vmatpush1.msra.mxu0 %v170
    %223 = vmatprep.subr.mxu0 0.0
    %224 = vmatpush1.msra.mxu0 %v171
    %225 = vmatprep.subr.mxu0 0.0
    %226 = vmatpush1.msra.mxu0 %v172
    %227 = vmatprep.subr.mxu0 0.0
    %228 = vmatpush1.msra.mxu0 %v173
    %229 = vmatprep.subr.mxu0 0.0
    %230 = vmatpush1.msra.mxu0 %v174
    %231 = vmatprep.subr.mxu0 0.0
    %232 = vmatpush1.msra.mxu0 %v175
    %233 = vmatprep.subr.mxu0 0.0
    %234 = vmatpush1.msra.mxu0 %v176
    %235 = vmatprep.subr.mxu0 0.0
    %236 = vmatpush1.msra.mxu0 %v177
    %237 = vmatprep.subr.mxu0 0.0
    %238 = vmatpush1.msra.mxu0 %v178
    %239 = vmatprep.subr.mxu0 0.0
    %240 = vmatpush1.msra.mxu0 %v179
    %241 = vmatprep.subr.mxu0 0.0
    %242 = vmatpush1.msra.mxu0 %v180
    %243 = vmatprep.subr.mxu0 0.0
    %244 = vmatpush1.msra.mxu0 %v181
    %245 = vmatprep.subr.mxu0 0.0
    %246 = vmatpush1.msra.mxu0 %v182
    %247 = vmatprep.subr.mxu0 0.0
    %248 = vmatpush1.msra.mxu0 %v183
    %249 = vmatprep.subr.mxu0 0.0
    %250 = vmatpush1.msra.mxu0 %v184
    %251 = vmatprep.subr.mxu0 0.0
    %252 = vmatpush1.msra.mxu0 %v185
    %253 = vmatprep.subr.mxu0 0.0
    %254 = vmatpush1.msra.mxu0 %v186
    %255 = vmatprep.subr.mxu0 0.0
    %256 = vmatpush1.msra.mxu0 %v187
    %257 = vmatprep.subr.mxu0 0.0
    %258 = vmatpush1.msra.mxu0 %v188
    %259 = vmatprep.subr.mxu0 0.0
    %260 = vmatpush1.msra.mxu0 %v189
    %261 = vmatprep.mubr.f32.mxu0 %v157
    %262 = vmatmul.mubr.f32.gmra.mrb[0].mxu0 %v156
    %v263 = vpop.f32.mrb[0].mxu0
    %v264 = vadd.f32 %v195, %v263
    %v265 = vpop.f32.mrb[0].mxu0
    %266 = vdwg.mxu0
    %v267 = vand.u32 2147483647, %v264
    %268 = vst [vmem:[#allocation8] sm:$0xff] %v267
    // Predicated region
    $region34: #{tpu_custom_call.1} parent=1 // pred_check
      _
    $region35: #{tpu_custom_call.1} parent=1 // pred_check_branch
      %270 = sbr.rel (0) target = $region37
    $region36: #{tpu_custom_call.1} parent=1 // pred_region
      %s272 = ssub.s32 128, 128
      %273 = vsyncadd [#allocation4], %s272
      %s275 = sshll.u32 [#allocation8], 4
      %s276 = int_to_ptr.vmem [resolvable:$true] %s275
      %278 = dma.vmem_to_hbm [thread:$0]  %s276, 128, %s5, [#allocation4]
    $region37: #{tpu_custom_call.1} parent=1 // pred_fallthru
      _
    // Predicated region
    $region38: #{tpu_custom_call.1} parent=1 // pred_check
      _
    $region39: #{tpu_custom_call.1} parent=1 // pred_check_branch
      %280 = sbr.rel (0) target = $region41
    $region40: #{tpu_custom_call.1} parent=1 // pred_region
      %281 = dma.done [#allocation4], 128
    $region41: #{tpu_custom_call.1} parent=1 // pred_fallthru
      _
    %282 = vsyncpa [#allocation3], 1
    %283 = vsyncpa [#allocation6], 1
    %284 = vsyncpa [#allocation4], 1

</llo_original>
